<compile_context>
chip_gen: v7x
topology: tpu7x:2x2x1
jax: 0.10.0
libtpu: 0.0.40
codegen_flags: <defaults>
</compile_context>

<pallas_src>
import functools

import jax
import jax.numpy as jnp
from jax.experimental import pallas as pl
from jax.experimental.pallas import tpu as pltpu

DELTA = 0.7
GAMMA = 2.0
EPSILON = 1e-07


def _focal_kernel(p_ref, t_ref, out_ref, *, gamma, epsilon,
                  neg_back_w, neg_fore_w, block_rows, lanes,
                  valid_rows, ragged):
    """One (block_rows, lanes) tile -> (8, lanes) lane-dense partial sums."""
    p = p_ref[...].astype(jnp.float32)
    t = t_ref[...].astype(jnp.float32)

    # torch.clamp(y_pred, eps, 1 - eps)
    p = jnp.clip(p, epsilon, 1.0 - epsilon)

    # cross_entropy = -y_true * log(y_pred); the '-' is folded into the
    # (negative) per-lane class weights below, so compute t * log(p) here.
    t_logp = t * jnp.log(p)

    # (1 - p)^gamma — specialize small integer gammas to VALU multiplies.
    om = 1.0 - p
    g = float(gamma)
    if g == 2.0:
        focal = om * om
    elif g == 0.0:
        focal = jnp.ones_like(om)
    elif g.is_integer() and g > 0:
        focal = om
        for _ in range(int(g) - 1):
            focal = focal * om
    else:
        focal = jnp.power(om, g)  # non-integer gamma fallback (EUP)

    # Per-lane class weight, generated in-kernel (channel == lane parity for
    # channel-last C=2 with even L).  Includes -1/(B*H*W) mean scale.
    lane = jax.lax.broadcasted_iota(jnp.int32, (1, lanes), 1)
    w = jnp.where((lane & 1) == 0,
                  jnp.float32(neg_back_w), jnp.float32(neg_fore_w))

    contrib = (w * focal) * t_logp

    if ragged:
        # Last block may extend past the valid rows; OOB VMEM contents are
        # unspecified (possibly NaN/Inf), so mask with a select AFTER compute.
        row = (jax.lax.broadcasted_iota(jnp.int32, (block_rows, lanes), 0)
               + pl.program_id(0) * block_rows)
        contrib = jnp.where(row < valid_rows, contrib, 0.0)

    # VALU-only row accumulation into an (8, lanes) partial (layout-aligned
    # reshape: each (8, L) slice is a contiguous sublane group).
    out_ref[...] = jnp.sum(contrib.reshape(block_rows // 8, 8, lanes), axis=0)


def symmetric_focal_loss(y_pred, y_true, *, delta=DELTA, gamma=GAMMA,
                         epsilon=EPSILON,
                         target_block_bytes=2 * 1024 * 1024,
                         max_rows=2048):
    """y_pred, y_true: [B, H, W, 2] channel-last, like the torch forward."""
    assert y_pred.shape == y_true.shape
    assert y_pred.ndim == 4, (
        "SymmetricFocalLoss kernel expects a 4-D (B, H, W, C) tensor.")
    B, H, W, C = y_pred.shape
    # The torch forward only indexes channels 0 and 1; require exactly 2 so
    # the lane-parity class-weight trick is valid.
    assert C == 2, "SymmetricFocalLoss kernel expects exactly 2 class channels."

    total_pixels = B * H * W
    n_elems = total_pixels * C

    p_flat = y_pred.reshape(-1)
    t_flat = y_true.reshape(-1)

    # Lane width: multiple of 128 (even => channel == lane % 2), dividing
    # n_elems (zero-copy reshape) and giving at least 8 rows.
    L = None
    for cand in (1024, 512, 256, 128):
        if n_elems % cand == 0 and n_elems // cand >= 8:
            L = cand
            break

    if L is None:
        # Rare fallback (odd shapes): pad the flat streams.  Padding with
        # t = 0, p = 0.5 contributes exactly zero for any lane parity.
        L = 128
        m_raw = max(8, -(-n_elems // L))
        m_raw = ((m_raw + 7) // 8) * 8
        n_pad = m_raw * L - n_elems
        if n_pad:
            p_flat = jnp.concatenate(
                [p_flat, jnp.full((n_pad,), 0.5, dtype=p_flat.dtype)])
            t_flat = jnp.concatenate(
                [t_flat, jnp.zeros((n_pad,), dtype=t_flat.dtype)])
    else:
        m_raw = n_elems // L

    p2 = p_flat.reshape(m_raw, L)
    t2 = t_flat.reshape(m_raw, L)

    # Rows per block: sized from a byte target (f32 element size), multiple
    # of 8, never larger than the (rounded-down) row count -> the only OOB
    # case is a standard ragged last block, masked in-kernel.
    target_rows = max(8, (target_block_bytes // (4 * L)) // 8 * 8)
    tm = min(target_rows, max_rows, (m_raw // 8) * 8)
    n_blocks = -(-m_raw // tm)
    ragged = (m_raw % tm) != 0

    kernel = functools.partial(
        _focal_kernel,
        gamma=float(gamma), epsilon=float(epsilon),
        neg_back_w=float(-(1.0 - delta) / total_pixels),
        neg_fore_w=float(-delta / total_pixels),
        block_rows=tm, lanes=L, valid_rows=m_raw, ragged=ragged)

    out_bytes = n_blocks * 8 * L * 4
    cost = pl.CostEstimate(
        flops=8 * n_elems,
        transcendentals=n_elems,
        bytes_accessed=(p2.size * p2.dtype.itemsize
                        + t2.size * t2.dtype.itemsize + out_bytes))

    partials = pl.pallas_call(
        kernel,
        out_shape=jax.ShapeDtypeStruct((n_blocks * 8, L), jnp.float32),
        grid_spec=pltpu.PrefetchScalarGridSpec(
            num_scalar_prefetch=0,
            grid=(n_blocks,),
            in_specs=[
                pl.BlockSpec((tm, L), lambda i: (i, 0)),
                pl.BlockSpec((tm, L), lambda i: (i, 0)),
            ],
            out_specs=pl.BlockSpec((8, L), lambda i: (i, 0)),
        ),
        compiler_params=pltpu.CompilerParams(
            dimension_semantics=("parallel",),
            vmem_limit_bytes=48 * 1024 * 1024),
        cost_estimate=cost,
    )(p2, t2)

    # Final cross-block / cross-lane / cross-sublane reduce in f32 outside.
    return jnp.sum(partials)


def _reference(y_pred, y_true, delta=DELTA, gamma=GAMMA, epsilon=EPSILON):
    """Pure-JAX transcription of the PyTorch forward, for verification."""
    y_pred = jnp.clip(y_pred, epsilon, 1.0 - epsilon)
    ce = -y_true * jnp.log(y_pred)
    back_ce = (1.0 - delta) * jnp.power(1.0 - y_pred[..., 0], gamma) * ce[..., 0]
    fore_ce = delta * jnp.power(1.0 - y_pred[..., 1], gamma) * ce[..., 1]
    return jnp.mean(back_ce + fore_ce)


def _make_inputs(key, B, H, W, true_dtype=jnp.float32):
    C = 2
    k1, k2 = jax.random.split(key)
    logits = jax.random.normal(k1, (B, H, W, C), dtype=jnp.float32)
    y_pred = jax.nn.softmax(logits, axis=-1)
    labels = jax.random.bernoulli(k2, p=0.5, shape=(B, H, W)).astype(jnp.int32)
    y_true = jax.nn.one_hot(labels, C, dtype=true_dtype)  # exact 0/1 values
    return y_pred, y_true


if __name__ == "__main__":
    key = jax.random.PRNGKey(0)
    k1, k2, k3 = jax.random.split(key, 3)

    # 1. Small shape: single (8, 128) block, f32 targets.
    yp1, yt1 = _make_inputs(k1, 2, 16, 16, true_dtype=jnp.float32)
    loss1 = jax.block_until_ready(symmetric_focal_loss(yp1, yt1))
    ref1 = _reference(yp1, yt1)
    assert jnp.allclose(loss1, ref1, rtol=1e-5, atol=1e-6), (loss1, ref1)

    # 2. Larger shape, bf16 one-hot targets (half the y_true HBM traffic).
    yp2, yt2 = _make_inputs(k2, 2, 192, 192, true_dtype=jnp.bfloat16)
    loss2 = jax.block_until_ready(symmetric_focal_loss(yp2, yt2))
    ref2 = _reference(yp2, yt2.astype(jnp.float32))
    assert jnp.allclose(loss2, ref2, rtol=1e-5, atol=1e-6), (loss2, ref2)

    # 3. Shape exercising the multi-block grid + ragged last-block row mask.
    yp3, yt3 = _make_inputs(k3, 2, 200, 144, true_dtype=jnp.bfloat16)
    loss3 = jax.block_until_ready(symmetric_focal_loss(yp3, yt3))
    ref3 = _reference(yp3, yt3.astype(jnp.float32))
    assert jnp.allclose(loss3, ref3, rtol=1e-5, atol=1e-6), (loss3, ref3)

    print("KERNEL_OK")
</pallas_src>

<mosaic_0001>
module attributes {stable_mosaic.version = 11 : i64} {
  func.func @_focal_kernel(%arg0: i32, %arg1: memref<8x128xf32, #tpu.memory_space<vmem>>, %arg2: memref<8x128xf32, #tpu.memory_space<vmem>>, %arg3: memref<8x128xf32, #tpu.memory_space<vmem>>) attributes {dimension_semantics = [#tpu.dimension_semantics<parallel>], iteration_bounds = array<i64: 1>, scalar_prefetch = 0 : i64, scratch_operands = 0 : i64, tpu.core_type = #tpu.core_type<tc>, window_params = [{transform_indices = @transform_0, window_bounds = array<i64: 8, 128>}, {transform_indices = @transform_1, window_bounds = array<i64: 8, 128>}, {transform_indices = @transform_2, window_bounds = array<i64: 8, 128>}]} {
    %c0 = arith.constant 0 : index
    %c0_0 = arith.constant 0 : index
    %0 = vector.load %arg1[%c0, %c0_0] : memref<8x128xf32, #tpu.memory_space<vmem>>, vector<8x128xf32>
    %c0_1 = arith.constant 0 : index
    %c0_2 = arith.constant 0 : index
    %1 = vector.load %arg2[%c0_1, %c0_2] : memref<8x128xf32, #tpu.memory_space<vmem>>, vector<8x128xf32>
    %cst = arith.constant 1.000000e-07 : f32
    %cst_3 = arith.constant 0.99999988 : f32
    %2 = vector.broadcast %cst : f32 to vector<8x128xf32>
    %3 = arith.maximumf %2, %0 : vector<8x128xf32>
    %4 = vector.broadcast %cst_3 : f32 to vector<8x128xf32>
    %5 = arith.minimumf %4, %3 : vector<8x128xf32>
    %6 = math.log %5 : vector<8x128xf32>
    %7 = arith.mulf %1, %6 : vector<8x128xf32>
    %cst_4 = arith.constant 1.000000e+00 : f32
    %8 = vector.broadcast %cst_4 : f32 to vector<8x128xf32>
    %9 = arith.subf %8, %5 : vector<8x128xf32>
    %10 = arith.mulf %9, %9 : vector<8x128xf32>
    %11 = tpu.iota {dimensions = array<i32: 1>} : vector<1x128xi32>
    %c1_i32 = arith.constant 1 : i32
    %12 = vector.broadcast %c1_i32 : i32 to vector<1x128xi32>
    %13 = arith.andi %11, %12 : vector<1x128xi32>
    %c0_i32 = arith.constant 0 : i32
    %14 = vector.broadcast %c0_i32 : i32 to vector<1x128xi32>
    %15 = arith.cmpi eq, %13, %14 : vector<1x128xi32>
    %cst_5 = arith.constant -5.85937523E-4 : f32
    %cst_6 = arith.constant -0.00136718748 : f32
    %16 = vector.broadcast %cst_5 : f32 to vector<1x128xf32>
    %17 = vector.broadcast %cst_6 : f32 to vector<1x128xf32>
    %18 = arith.select %15, %16, %17 : vector<1x128xi1>, vector<1x128xf32>
    %19 = vector.broadcast %18 : vector<1x128xf32> to vector<8x128xf32>
    %20 = arith.mulf %19, %10 : vector<8x128xf32>
    %21 = arith.mulf %20, %7 : vector<8x128xf32>
    %22 = vector.shape_cast %21 : vector<8x128xf32> to vector<1x8x128xf32>
    %cst_7 = arith.constant dense<0.000000e+00> : vector<8x128xf32>
    %23 = vector.multi_reduction <add>, %22, %cst_7 [0] : vector<1x8x128xf32> to vector<8x128xf32>
    %c0_8 = arith.constant 0 : index
    %c0_9 = arith.constant 0 : index
    %24 = vector.load %arg3[%c0_8, %c0_9] : memref<8x128xf32, #tpu.memory_space<vmem>>, vector<8x128xf32>
    tpu.vector_store %arg3[%c0_8, %c0_9], %23 {strides = array<i32>} : memref<8x128xf32, #tpu.memory_space<vmem>>, vector<8x128xf32>,
    return
  }
  func.func @transform_0(%arg0: i32) -> (i32, i32) {
    %c0_i32 = arith.constant 0 : i32
    %c0_i32_0 = arith.constant 0 : i32
    return %arg0, %c0_i32 : i32, i32
  }
  func.func @transform_1(%arg0: i32) -> (i32, i32) {
    %c0_i32 = arith.constant 0 : i32
    %c0_i32_0 = arith.constant 0 : i32
    return %arg0, %c0_i32 : i32, i32
  }
  func.func @transform_2(%arg0: i32) -> (i32, i32) {
    %c0_i32 = arith.constant 0 : i32
    %c0_i32_0 = arith.constant 0 : i32
    return %arg0, %c0_i32 : i32, i32
  }
}

</mosaic_0001>

<llo_original>
// kernel: tpu_custom_call.1
$region0: #{tpu_custom_call.1}
  #allocation0 [shape = 'u32[]', space=smem, size = 0x4, offset = 0x4, fixed_abs, tag = 'smem constant byte address 0x4 - core index']
  #allocation1 [shape = 'u32[144,128]{1,0:T(1,128)}', space=vmem, size = 0x12000, scoped, tag = 'internal scratch']
  %s0 = inlined_call_operand.hbm [shape: f32[8,128], index: 0, kind: input, shape index: {}]
  %s1 = inlined_call_operand.hbm [shape: f32[8,128], index: 1, kind: input, shape index: {}]
  %s2 = inlined_call_operand.hbm [shape: f32[8,128], index: 2, kind: output, shape index: {}]
  %s3 = sld [smem:[#allocation0]]
  $region26: #{tpu_custom_call.1} parent=0
    _
  %s5 = ssub.s32 1, %s3
  %s6 = scalar_select 0, %s5, %s3
  $region1: #{tpu_custom_call.1} parent=0
    #allocation2 [shape = 'u8[4096]{0}', space=vmem, size = 0x1000, scoped, tag = 'input window, operand 0, single buffered']
    #allocation3 [shape = 's32[1]{0}', space=sflag, size = 0x4, scoped, tag = 'scoped memory for tpu_custom_call.1']
    #allocation4 [shape = 's32[1]{0}', space=sflag, size = 0x4, scoped, tag = 'scoped memory for tpu_custom_call.1']
    #allocation5 [shape = 'u8[4096]{0}', space=vmem, size = 0x1000, scoped, tag = 'input window, operand 1, single buffered']
    #allocation6 [shape = 's32[1]{0}', space=sflag, size = 0x4, scoped, tag = 'scoped memory for tpu_custom_call.1']
    #allocation7 [shape = 'u8[4096]{0}', space=vmem, size = 0x1000, scoped, tag = 'output window, operand 0, single buffered']
    %7 = vsyncpa [#allocation3], 0
    %8 = vsyncpa [#allocation6], 0
    %9 = vsyncpa [#allocation4], 0
    // Predicated region
    $region2: #{tpu_custom_call.1} parent=1 // pred_check
      _
    $region3: #{tpu_custom_call.1} parent=1 // pred_check_branch
      %11 = sbr.rel (0) target = $region5
    $region4: #{tpu_custom_call.1} parent=1 // pred_region
      %s13 = ssub.s32 128, 128
      %14 = vsyncadd [#allocation3], %s13
      %s16 = sshll.u32 [#allocation2], 4
      %s17 = int_to_ptr.vmem [resolvable:$true] %s16
      %19 = dma.hbm_to_vmem [thread:$0]  %s0, 128, %s17, [#allocation3]
    $region5: #{tpu_custom_call.1} parent=1 // pred_fallthru
      _
    // Predicated region
    $region6: #{tpu_custom_call.1} parent=1 // pred_check
      _
    $region7: #{tpu_custom_call.1} parent=1 // pred_check_branch
      %21 = sbr.rel (0) target = $region9
    $region8: #{tpu_custom_call.1} parent=1 // pred_region
      %s23 = ssub.s32 128, 128
      %24 = vsyncadd [#allocation6], %s23
      %s26 = sshll.u32 [#allocation5], 4
      %s27 = int_to_ptr.vmem [resolvable:$true] %s26
      %29 = dma.hbm_to_vmem [thread:$0]  %s1, 128, %s27, [#allocation6]
    $region9: #{tpu_custom_call.1} parent=1 // pred_fallthru
      _
    // Predicated region
    $region10: #{tpu_custom_call.1} parent=1 // pred_check
      _
    $region11: #{tpu_custom_call.1} parent=1 // pred_check_branch
      %31 = sbr.rel (0) target = $region13
    $region12: #{tpu_custom_call.1} parent=1 // pred_region
      %32 = dma.done [#allocation3], 128
    $region13: #{tpu_custom_call.1} parent=1 // pred_fallthru
      _
    // Predicated region
    $region14: #{tpu_custom_call.1} parent=1 // pred_check
      _
    $region15: #{tpu_custom_call.1} parent=1 // pred_check_branch
      %34 = sbr.rel (0) target = $region17
    $region16: #{tpu_custom_call.1} parent=1 // pred_region
      %35 = dma.done [#allocation6], 128
    $region17: #{tpu_custom_call.1} parent=1 // pred_fallthru
      _
    %v36 = vld [vmem:[#allocation2] sm:$0xff]
    %v37 = vld [vmem:[#allocation5] sm:$0xff]
    %v38 = vmax.f32 %v36, 1e-07
    %v39 = vmin.f32 %v38, 0.9999999
    %v40 = vlog2.pop %v39
    %v41 = vmul.f32 %v40, 0.6931472
    %v42 = vmul.f32 %v37, %v41
    %v43 = vsub.f32 1.0, %v39
    %v44 = vmul.f32 %v43, %v43
    %v45 = vlaneseq
    %v46 = vand.u32 %v45, 127
    %v47 = vand.u32 %v46, 1
    %vm48 = vcmp.eq.s32.totalorder %v47, 0
    %v49 = vsel %vm48, -0.0005859375, -0.0013671875
    %v50 = vmul.f32 %v49, %v44
    %v51 = vmul.f32 %v50, %v42
    %v52 = vadd.f32 %v51, 0.0
    %53 = vst [vmem:[#allocation7] sm:$0xff] %v52
    // Predicated region
    $region18: #{tpu_custom_call.1} parent=1 // pred_check
      _
    $region19: #{tpu_custom_call.1} parent=1 // pred_check_branch
      %55 = sbr.rel (0) target = $region21
    $region20: #{tpu_custom_call.1} parent=1 // pred_region
      %s57 = ssub.s32 128, 128
      %58 = vsyncadd [#allocation4], %s57
      %s60 = sshll.u32 [#allocation7], 4
      %s61 = int_to_ptr.vmem [resolvable:$true] %s60
      %63 = dma.vmem_to_hbm [thread:$0]  %s61, 128, %s2, [#allocation4]
    $region21: #{tpu_custom_call.1} parent=1 // pred_fallthru
      _
    // Predicated region
    $region22: #{tpu_custom_call.1} parent=1 // pred_check
      _
    $region23: #{tpu_custom_call.1} parent=1 // pred_check_branch
      %65 = sbr.rel (0) target = $region25
    $region24: #{tpu_custom_call.1} parent=1 // pred_region
      %66 = dma.done [#allocation4], 128
    $region25: #{tpu_custom_call.1} parent=1 // pred_fallthru
      _
    %67 = vsyncpa [#allocation3], 1
    %68 = vsyncpa [#allocation6], 1
    %69 = vsyncpa [#allocation4], 1

</llo_original>
